<compile_context>
chip_gen: v6e
topology: v6e:2x2x1
jax: 0.10.0
libtpu: 0.0.40
codegen_flags: <defaults>
</compile_context>

<pallas_src>
import functools
import math

import jax
import jax.numpy as jnp
from jax.experimental import pallas as pl
from jax.experimental.pallas import tpu as pltpu


VMEM_LIMIT_BYTES = 32 * 1024 * 1024  # safe on all gens, above v5e's 16 MiB default scoped limit


# ----------------------------------------------------------------------------- utils
def _row_tile(r: int, max_tile: int = 512) -> int:
    """Largest row tile (multiple of 8 when possible) that evenly divides r."""
    for t in (max_tile, 256, 128, 64, 32, 16, 8):
        if t <= r and r % t == 0:
            return t
    return r  # small / odd row count -> single full block (always legal)


def _seq_tile(n: int, max_tile: int = 256) -> int:
    for t in (max_tile, 128, 64, 32, 16, 8):
        if t <= n and n % t == 0:
            return t
    return n


def _itemsize(x) -> int:
    return jnp.dtype(x.dtype).itemsize


# ----------------------------------------------------------------------------- fused QKV projection
def _qkv_kernel(x_ref, w_ref, q_ref, k_ref, v_ref, *, H):
    x = x_ref[...].astype(jnp.float32)
    w = w_ref[...].astype(jnp.float32)
    y = jnp.dot(x, w, preferred_element_type=jnp.float32)   # (tr, 3H), single wide MXU pass
    q_ref[...] = y[:, 0 * H:1 * H].astype(q_ref.dtype)
    k_ref[...] = y[:, 1 * H:2 * H].astype(k_ref.dtype)
    v_ref[...] = y[:, 2 * H:3 * H].astype(v_ref.dtype)


def qkv_projection(x2d, wqkv, H):
    """q, k, v = split(x @ [wq|wk|wv]); x2d: (R, emb), wqkv: (emb, 3H). No bias (matches torch)."""
    r, kdim = x2d.shape
    n3 = wqkv.shape[1]
    tr = _row_tile(r)
    kernel = functools.partial(_qkv_kernel, H=H)
    bytes_acc = (r * kdim + kdim * n3 + 3 * r * H) * _itemsize(x2d)
    return pl.pallas_call(
        kernel,
        out_shape=tuple(jax.ShapeDtypeStruct((r, H), x2d.dtype) for _ in range(3)),
        grid_spec=pltpu.PrefetchScalarGridSpec(
            num_scalar_prefetch=0,
            grid=(r // tr,),
            in_specs=[
                pl.BlockSpec((tr, kdim), lambda i: (i, 0)),
                pl.BlockSpec((kdim, n3), lambda i: (0, 0)),
            ],
            out_specs=tuple(pl.BlockSpec((tr, H), lambda i: (i, 0)) for _ in range(3)),
        ),
        compiler_params=pltpu.CompilerParams(
            dimension_semantics=("parallel",),
            vmem_limit_bytes=VMEM_LIMIT_BYTES),
        cost_estimate=pl.CostEstimate(flops=2 * r * kdim * n3, transcendentals=0,
                                      bytes_accessed=bytes_acc),
    )(x2d, wqkv)


# ----------------------------------------------------------------------------- flash attention (lane-dense, heads in-kernel)
def _mha_flash_kernel(q_ref, k_ref, v_ref, o_ref, m_sc, l_sc, acc_sc,
                      *, heads, hidden, scale, causal, tq, tk):
    qi = pl.program_id(1)
    ki = pl.program_id(2)
    nk = pl.num_programs(2)

    @pl.when(ki == 0)
    def _init():
        m_sc[...] = jnp.full(m_sc.shape, -jnp.inf, dtype=m_sc.dtype)
        l_sc[...] = jnp.zeros(l_sc.shape, dtype=l_sc.dtype)
        acc_sc[...] = jnp.zeros(acc_sc.shape, dtype=acc_sc.dtype)

    def compute():
        qb = q_ref[0].astype(jnp.float32)       # (tq, H) lane-dense load
        kb = k_ref[0].astype(jnp.float32)       # (tk, H)
        vb = v_ref[0].astype(jnp.float32)       # (tk, H)
        if causal:
            row = qi * tq + jax.lax.broadcasted_iota(jnp.int32, (tq, tk), 0)
            col = ki * tk + jax.lax.broadcasted_iota(jnp.int32, (tq, tk), 1)
            mask = row >= col                   # built once per tile, shared by all heads
        for h in range(heads):                  # static unroll over heads
            lo, hi = h * hidden, (h + 1) * hidden
            qh = qb[:, lo:hi] * scale           # single combined scale (== (q/sqrt(h))·(k/sqrt(h)))
            kh = kb[:, lo:hi]
            vh = vb[:, lo:hi]
            s = jax.lax.dot_general(qh, kh, (((1,), (1,)), ((), ())),
                                    preferred_element_type=jnp.float32)     # (tq, tk)
            if causal:
                s = jnp.where(mask, s, -1e30)
            m_prev = m_sc[h]                                              # (tq, 1)
            m_new = jnp.maximum(m_prev, jnp.max(s, axis=-1, keepdims=True))
            alpha = jnp.exp(m_prev - m_new)
            p = jnp.exp(s - m_new)
            l_sc[h] = alpha * l_sc[h] + jnp.sum(p, axis=-1, keepdims=True)
            acc_sc[h] = alpha * acc_sc[h] + jnp.dot(p, vh, preferred_element_type=jnp.float32)
            m_sc[h] = m_new

    if causal:
        # Skip kv tiles that lie entirely in the masked (future) region.
        pl.when(ki * tk <= qi * tq + (tq - 1))(compute)
    else:
        compute()

    @pl.when(ki == nk - 1)
    def _finalize():
        for h in range(heads):
            lo, hi = h * hidden, (h + 1) * hidden
            inv = pl.reciprocal(l_sc[h], approx=True)        # EUP slot, effectively free
            o_ref[0, :, lo:hi] = (acc_sc[h] * inv).astype(o_ref.dtype)


def attention(q, k, v, *, heads, hidden, causal=True):
    """q, k, v: (bs, n, heads*hidden) -> (bs, n, heads*hidden); no HBM transposes."""
    bs, n, H = q.shape
    assert H == heads * hidden
    t = _seq_tile(n)
    nq = n // t
    nk = n // t
    scale = 1.0 / float(hidden)   # q and k each scaled by 1/sqrt(hidden) in torch -> net 1/hidden
    kernel = functools.partial(_mha_flash_kernel, heads=heads, hidden=hidden,
                               scale=scale, causal=causal, tq=t, tk=t)
    blk = (1, t, H)
    bytes_acc = 4 * bs * n * H * _itemsize(q)
    return pl.pallas_call(
        kernel,
        out_shape=jax.ShapeDtypeStruct((bs, n, H), q.dtype),
        grid_spec=pltpu.PrefetchScalarGridSpec(
            num_scalar_prefetch=0,
            grid=(bs, nq, nk),
            in_specs=[
                pl.BlockSpec(blk, lambda b, qi, ki: (b, qi, 0)),
                pl.BlockSpec(blk, lambda b, qi, ki: (b, ki, 0)),
                pl.BlockSpec(blk, lambda b, qi, ki: (b, ki, 0)),
            ],
            out_specs=pl.BlockSpec(blk, lambda b, qi, ki: (b, qi, 0)),
            scratch_shapes=[
                pltpu.VMEM((heads, t, 1), jnp.float32),        # running max m
                pltpu.VMEM((heads, t, 1), jnp.float32),        # running sum l
                pltpu.VMEM((heads, t, hidden), jnp.float32),   # running acc
            ],
        ),
        compiler_params=pltpu.CompilerParams(
            dimension_semantics=("parallel", "parallel", "arbitrary"),
            vmem_limit_bytes=VMEM_LIMIT_BYTES),
        cost_estimate=pl.CostEstimate(flops=4 * bs * heads * n * n * hidden,
                                      transcendentals=bs * heads * n * n,
                                      bytes_accessed=bytes_acc),
    )(q, k, v)


# ----------------------------------------------------------------------------- unifyheads + residual + LayerNorm (fused)
def _proj_res_ln_kernel(a_ref, w_ref, b_ref, res_ref, g_ref, be_ref, o_ref, *, eps):
    a = a_ref[...].astype(jnp.float32)
    w = w_ref[...].astype(jnp.float32)
    y = jnp.dot(a, w, preferred_element_type=jnp.float32)
    y = y + b_ref[...].astype(jnp.float32) + res_ref[...].astype(jnp.float32)
    mean = jnp.mean(y, axis=-1, keepdims=True)
    yc = y - mean
    var = jnp.mean(yc * yc, axis=-1, keepdims=True)
    out = yc * jax.lax.rsqrt(var + eps)
    out = out * g_ref[...].astype(jnp.float32) + be_ref[...].astype(jnp.float32)
    o_ref[...] = out.astype(o_ref.dtype)


def proj_res_ln(a, w, b, res, gamma, beta, eps=1e-5):
    """LayerNorm(a @ w + b + res); a: (R, K), w: (K, N), res: (R, N)."""
    r, kdim = a.shape
    n = w.shape[1]
    tr = _row_tile(r)
    kernel = functools.partial(_proj_res_ln_kernel, eps=eps)
    bytes_acc = (r * kdim + kdim * n + 2 * r * n) * _itemsize(a)
    return pl.pallas_call(
        kernel,
        out_shape=jax.ShapeDtypeStruct((r, n), a.dtype),
        grid_spec=pltpu.PrefetchScalarGridSpec(
            num_scalar_prefetch=0,
            grid=(r // tr,),
            in_specs=[
                pl.BlockSpec((tr, kdim), lambda i: (i, 0)),
                pl.BlockSpec((kdim, n), lambda i: (0, 0)),
                pl.BlockSpec((1, n), lambda i: (0, 0)),
                pl.BlockSpec((tr, n), lambda i: (i, 0)),
                pl.BlockSpec((1, n), lambda i: (0, 0)),
                pl.BlockSpec((1, n), lambda i: (0, 0)),
            ],
            out_specs=pl.BlockSpec((tr, n), lambda i: (i, 0)),
        ),
        compiler_params=pltpu.CompilerParams(
            dimension_semantics=("parallel",),
            vmem_limit_bytes=VMEM_LIMIT_BYTES),
        cost_estimate=pl.CostEstimate(flops=2 * r * kdim * n + 8 * r * n, transcendentals=r,
                                      bytes_accessed=bytes_acc),
    )(a, w, b.reshape(1, n), res, gamma.reshape(1, n), beta.reshape(1, n))


# ----------------------------------------------------------------------------- FFN (Linear->ReLU->Linear) + residual + LayerNorm (fused)
def _ffn_res_ln_kernel(x_ref, w1_ref, b1_ref, w2_ref, b2_ref, g_ref, be_ref, o_ref, *, eps):
    x = x_ref[...].astype(jnp.float32)
    h = jnp.dot(x, w1_ref[...].astype(jnp.float32), preferred_element_type=jnp.float32)
    h = jnp.maximum(h + b1_ref[...].astype(jnp.float32), 0.0)     # hidden act stays in VMEM
    y = jnp.dot(h, w2_ref[...].astype(jnp.float32), preferred_element_type=jnp.float32)
    y = y + b2_ref[...].astype(jnp.float32) + x
    mean = jnp.mean(y, axis=-1, keepdims=True)
    yc = y - mean
    var = jnp.mean(yc * yc, axis=-1, keepdims=True)
    out = yc * jax.lax.rsqrt(var + eps)
    out = out * g_ref[...].astype(jnp.float32) + be_ref[...].astype(jnp.float32)
    o_ref[...] = out.astype(o_ref.dtype)


def ffn_res_ln(x, w1, b1, w2, b2, gamma, beta, eps=1e-5):
    """LayerNorm(relu(x @ w1 + b1) @ w2 + b2 + x); x: (R, emb)."""
    r, emb = x.shape
    f = w1.shape[1]
    tr = _row_tile(r)
    # TODO(synk): for very large emb on v7x (64 MiB VMEM), add an N/K grid axis with an f32
    # accumulator instead of keeping both FF weights fully resident.
    kernel = functools.partial(_ffn_res_ln_kernel, eps=eps)
    bytes_acc = (2 * r * emb + emb * f + f * emb) * _itemsize(x)
    return pl.pallas_call(
        kernel,
        out_shape=jax.ShapeDtypeStruct((r, emb), x.dtype),
        grid_spec=pltpu.PrefetchScalarGridSpec(
            num_scalar_prefetch=0,
            grid=(r // tr,),
            in_specs=[
                pl.BlockSpec((tr, emb), lambda i: (i, 0)),
                pl.BlockSpec((emb, f), lambda i: (0, 0)),
                pl.BlockSpec((1, f), lambda i: (0, 0)),
                pl.BlockSpec((f, emb), lambda i: (0, 0)),
                pl.BlockSpec((1, emb), lambda i: (0, 0)),
                pl.BlockSpec((1, emb), lambda i: (0, 0)),
                pl.BlockSpec((1, emb), lambda i: (0, 0)),
            ],
            out_specs=pl.BlockSpec((tr, emb), lambda i: (i, 0)),
        ),
        compiler_params=pltpu.CompilerParams(
            dimension_semantics=("parallel",),
            vmem_limit_bytes=VMEM_LIMIT_BYTES),
        cost_estimate=pl.CostEstimate(flops=4 * r * emb * f + 10 * r * emb, transcendentals=r,
                                      bytes_accessed=bytes_acc),
    )(x, w1, b1.reshape(1, f), w2, b2.reshape(1, emb),
      gamma.reshape(1, emb), beta.reshape(1, emb))


# ----------------------------------------------------------------------------- transformer block
def transformer_block_forward(x, p, *, heads, hidden, causal=True):
    bs, n, emb = x.shape
    H = heads * hidden
    x2d = x.reshape(bs * n, emb)

    # Fused QKV projection: x read from HBM once, single kernel launch.
    wqkv = jnp.concatenate([p["wq"], p["wk"], p["wv"]], axis=1)     # (emb, 3H)
    q, k, v = qkv_projection(x2d, wqkv, H)                          # each (bs*n, H)

    # Lane-dense attention: no head split/merge transposes, heads handled in-kernel.
    att = attention(q.reshape(bs, n, H), k.reshape(bs, n, H), v.reshape(bs, n, H),
                    heads=heads, hidden=hidden, causal=causal)      # (bs, n, H)

    # unifyheads + residual + LayerNorm1, fused.
    x1 = proj_res_ln(att.reshape(bs * n, H), p["wo"], p["bo"], x2d, p["ln1_g"], p["ln1_b"])
    # TODO(synk): nn.Dropout omitted (p=0 default / eval mode -> identity).

    # FF (Linear->ReLU->Linear) + residual + LayerNorm2, fused.
    x2 = ffn_res_ln(x1, p["ff1_w"], p["ff1_b"], p["ff2_w"], p["ff2_b"], p["ln2_g"], p["ln2_b"])
    return x2.reshape(bs, n, emb)


def stacked_transformer_forward(x, params, *, heads, hidden, causal=True):
    for p in params:
        x = transformer_block_forward(x, p, heads=heads, hidden=hidden, causal=causal)
    return x


# ----------------------------------------------------------------------------- pure-JAX reference
def _ref_layernorm(x, g, b, eps=1e-5):
    mean = jnp.mean(x, axis=-1, keepdims=True)
    var = jnp.mean((x - mean) ** 2, axis=-1, keepdims=True)
    return (x - mean) * jax.lax.rsqrt(var + eps) * g + b


def _ref_block(x, p, *, heads, hidden, causal):
    bs, n, emb = x.shape
    q = x @ p["wq"]
    k = x @ p["wk"]
    v = x @ p["wv"]

    def split(t):
        return t.reshape(bs, n, heads, hidden).transpose(0, 2, 1, 3)

    q, k, v = split(q), split(k), split(v)
    scale = 1.0 / math.sqrt(hidden)
    logits = jnp.einsum("bhqd,bhkd->bhqk", q * scale, k * scale)
    if causal:
        row = jnp.arange(n)[:, None]
        col = jnp.arange(n)[None, :]
        logits = jnp.where(row >= col, logits, -1e30)
    w = jax.nn.softmax(logits, axis=-1)
    out = jnp.einsum("bhqk,bhkd->bhqd", w, v)
    out = out.transpose(0, 2, 1, 3).reshape(bs, n, heads * hidden)
    attended = out @ p["wo"] + p["bo"]

    x1 = _ref_layernorm(attended + x, p["ln1_g"], p["ln1_b"])
    ff = jnp.maximum(x1 @ p["ff1_w"] + p["ff1_b"], 0.0) @ p["ff2_w"] + p["ff2_b"]
    return _ref_layernorm(ff + x1, p["ln2_g"], p["ln2_b"])


def _ref_stacked(x, params, *, heads, hidden, causal):
    for p in params:
        x = _ref_block(x, p, heads=heads, hidden=hidden, causal=causal)
    return x


# ----------------------------------------------------------------------------- main
if __name__ == "__main__":
    jax.config.update("jax_default_matmul_precision", "highest")

    key = jax.random.PRNGKey(0)
    bs, n, emb = 2, 16, 32
    heads, hidden, ff_mult, depth = 4, 8, 4, 2
    dtype = jnp.float32

    key, xk = jax.random.split(key)
    x = jax.random.normal(xk, (bs, n, emb), dtype)

    params = []
    for layer in range(depth):
        lk = jax.random.fold_in(key, layer)
        ks = jax.random.split(lk, 8)
        be = 1.0 / math.sqrt(emb)
        bh = 1.0 / math.sqrt(heads * hidden)
        bf = 1.0 / math.sqrt(ff_mult * emb)
        params.append({
            "wq": jax.random.uniform(ks[0], (emb, heads * hidden), dtype, -be, be),
            "wk": jax.random.uniform(ks[1], (emb, heads * hidden), dtype, -be, be),
            "wv": jax.random.uniform(ks[2], (emb, heads * hidden), dtype, -be, be),
            "wo": jax.random.uniform(ks[3], (heads * hidden, emb), dtype, -bh, bh),
            "bo": jax.random.uniform(ks[4], (emb,), dtype, -bh, bh),
            "ln1_g": jnp.ones((emb,), dtype),
            "ln1_b": jnp.zeros((emb,), dtype),
            "ff1_w": jax.random.uniform(ks[5], (emb, ff_mult * emb), dtype, -be, be),
            "ff1_b": jax.random.uniform(ks[6], (ff_mult * emb,), dtype, -be, be),
            "ff2_w": jax.random.uniform(ks[7], (ff_mult * emb, emb), dtype, -bf, bf),
            "ff2_b": jnp.zeros((emb,), dtype),
            "ln2_g": jnp.ones((emb,), dtype),
            "ln2_b": jnp.zeros((emb,), dtype),
        })

    y = stacked_transformer_forward(x, params, heads=heads, hidden=hidden, causal=True)
    y = jax.block_until_ready(y)

    y_ref = _ref_stacked(x, params, heads=heads, hidden=hidden, causal=True)
    assert y.shape == (bs, n, emb), y.shape
    max_err = float(jnp.max(jnp.abs(y - y_ref)))
    assert jnp.allclose(y, y_ref, atol=5e-3, rtol=5e-3), f"max abs err {max_err}"

    print("KERNEL_OK")
</pallas_src>

<mosaic_0001>
module attributes {stable_mosaic.version = 11 : i64} {
  func.func @_qkv_kernel(%arg0: i32, %arg1: memref<32x32xf32, #tpu.memory_space<vmem>>, %arg2: memref<32x96xf32, #tpu.memory_space<vmem>>, %arg3: memref<32x32xf32, #tpu.memory_space<vmem>>, %arg4: memref<32x32xf32, #tpu.memory_space<vmem>>, %arg5: memref<32x32xf32, #tpu.memory_space<vmem>>) attributes {dimension_semantics = [#tpu.dimension_semantics<parallel>], iteration_bounds = array<i64: 1>, scalar_prefetch = 0 : i64, scratch_operands = 0 : i64, tpu.core_type = #tpu.core_type<tc>, window_params = [{transform_indices = @transform_0, window_bounds = array<i64: 32, 32>}, {pipeline_mode = #tpu.pipeline_mode<synchronous>, transform_indices = @transform_1, window_bounds = array<i64: 32, 96>}, {transform_indices = @transform_2, window_bounds = array<i64: 32, 32>}, {transform_indices = @transform_3, window_bounds = array<i64: 32, 32>}, {transform_indices = @transform_4, window_bounds = array<i64: 32, 32>}]} {
    %c0 = arith.constant 0 : index
    %c0_0 = arith.constant 0 : index
    %0 = vector.load %arg1[%c0, %c0_0] : memref<32x32xf32, #tpu.memory_space<vmem>>, vector<32x32xf32>
    %c0_1 = arith.constant 0 : index
    %c0_2 = arith.constant 0 : index
    %1 = vector.load %arg2[%c0_1, %c0_2] : memref<32x96xf32, #tpu.memory_space<vmem>>, vector<32x96xf32>
    %cst = arith.constant dense<0.000000e+00> : vector<32x96xf32>
    %2 = tpu.matmul %0, %1, %cst {dimension_numbers = #tpu.dot_dimension_numbers<[1], [0], [0], [1], [0, 0, 1, 1], [], []>, precision = #tpu.contract_precision<fp32>} : vector<32x32xf32>, vector<32x96xf32>, vector<32x96xf32> -> vector<32x96xf32>
    %3 = vector.extract_strided_slice %2 {offsets = [0, 0], sizes = [32, 32], strides = [1, 1]} : vector<32x96xf32> to vector<32x32xf32>
    %c0_3 = arith.constant 0 : index
    %c0_4 = arith.constant 0 : index
    %4 = vector.load %arg3[%c0_3, %c0_4] : memref<32x32xf32, #tpu.memory_space<vmem>>, vector<32x32xf32>
    tpu.vector_store %arg3[%c0_3, %c0_4], %3 {strides = array<i32>} : memref<32x32xf32, #tpu.memory_space<vmem>>, vector<32x32xf32>,
    %5 = vector.extract_strided_slice %2 {offsets = [0, 32], sizes = [32, 32], strides = [1, 1]} : vector<32x96xf32> to vector<32x32xf32>
    %c0_5 = arith.constant 0 : index
    %c0_6 = arith.constant 0 : index
    %6 = vector.load %arg4[%c0_5, %c0_6] : memref<32x32xf32, #tpu.memory_space<vmem>>, vector<32x32xf32>
    tpu.vector_store %arg4[%c0_5, %c0_6], %5 {strides = array<i32>} : memref<32x32xf32, #tpu.memory_space<vmem>>, vector<32x32xf32>,
    %7 = vector.extract_strided_slice %2 {offsets = [0, 64], sizes = [32, 32], strides = [1, 1]} : vector<32x96xf32> to vector<32x32xf32>
    %c0_7 = arith.constant 0 : index
    %c0_8 = arith.constant 0 : index
    %8 = vector.load %arg5[%c0_7, %c0_8] : memref<32x32xf32, #tpu.memory_space<vmem>>, vector<32x32xf32>
    tpu.vector_store %arg5[%c0_7, %c0_8], %7 {strides = array<i32>} : memref<32x32xf32, #tpu.memory_space<vmem>>, vector<32x32xf32>,
    return
  }
  func.func @transform_0(%arg0: i32) -> (i32, i32) {
    %c0_i32 = arith.constant 0 : i32
    %c0_i32_0 = arith.constant 0 : i32
    return %arg0, %c0_i32 : i32, i32
  }
  func.func @transform_1(%arg0: i32) -> (i32, i32) {
    %c0_i32 = arith.constant 0 : i32
    %c0_i32_0 = arith.constant 0 : i32
    %c0_i32_1 = arith.constant 0 : i32
    return %c0_i32, %c0_i32_0 : i32, i32
  }
  func.func @transform_2(%arg0: i32) -> (i32, i32) {
    %c0_i32 = arith.constant 0 : i32
    %c0_i32_0 = arith.constant 0 : i32
    return %arg0, %c0_i32 : i32, i32
  }
  func.func @transform_3(%arg0: i32) -> (i32, i32) {
    %c0_i32 = arith.constant 0 : i32
    %c0_i32_0 = arith.constant 0 : i32
    return %arg0, %c0_i32 : i32, i32
  }
  func.func @transform_4(%arg0: i32) -> (i32, i32) {
    %c0_i32 = arith.constant 0 : i32
    %c0_i32_0 = arith.constant 0 : i32
    return %arg0, %c0_i32 : i32, i32
  }
}

</mosaic_0001>

<llo_original>
// kernel: tpu_custom_call.1
$region0: #{tpu_custom_call.1}
  #allocation0 [shape = 'u32[]', space=smem, size = 0x4, offset = 0x4, fixed_abs, tag = 'smem constant byte address 0x4 - core index']
  #allocation1 [shape = 'u32[144,128]{1,0:T(1,128)}', space=vmem, size = 0x12000, scoped, tag = 'internal scratch']
  %s0 = inlined_call_operand.hbm [shape: f32[32,32], index: 0, kind: input, shape index: {}]
  %s1 = inlined_call_operand.hbm [shape: f32[32,96], index: 1, kind: input, shape index: {}]
  %s2 = inlined_call_operand.hbm [shape: f32[32,32], index: 2, kind: output, shape index: {0}]
  %s3 = inlined_call_operand.hbm [shape: f32[32,32], index: 3, kind: output, shape index: {1}]
  %s4 = inlined_call_operand.hbm [shape: f32[32,32], index: 4, kind: output, shape index: {2}]
  %5 = xla_tuple %s2, %s3, %s4
  %s6 = sld [smem:[#allocation0]]
  $region42: #{tpu_custom_call.1} parent=0
    _
  %s8 = ssub.s32 1, %s6
  %s9 = scalar_select 0, %s8, %s6
  $region1: #{tpu_custom_call.1} parent=0
    #allocation2 [shape = 'u8[16384]{0}', space=vmem, size = 0x4000, scoped, tag = 'input window, operand 0, single buffered']
    #allocation3 [shape = 's32[1]{0}', space=sflag, size = 0x4, scoped, tag = 'scoped memory for tpu_custom_call.1']
    #allocation4 [shape = 's32[1]{0}', space=sflag, size = 0x4, scoped, tag = 'scoped memory for tpu_custom_call.1']
    #allocation5 [shape = 'u8[16384]{0}', space=vmem, size = 0x4000, scoped, tag = 'input window, operand 1, single buffered']
    #allocation6 [shape = 's32[1]{0}', space=sflag, size = 0x4, scoped, tag = 'scoped memory for tpu_custom_call.1']
    #allocation7 [shape = 'u8[16384]{0}', space=vmem, size = 0x4000, scoped, tag = 'output window, operand 0, single buffered']
    #allocation8 [shape = 'u8[16384]{0}', space=vmem, size = 0x4000, scoped, tag = 'output window, operand 1, single buffered']
    #allocation9 [shape = 's32[1]{0}', space=sflag, size = 0x4, scoped, tag = 'scoped memory for tpu_custom_call.1']
    #allocation10 [shape = 'u8[16384]{0}', space=vmem, size = 0x4000, scoped, tag = 'output window, operand 2, single buffered']
    %10 = vsyncpa [#allocation3], 0
    %11 = vsyncpa [#allocation6], 0
    %12 = vsyncpa [#allocation4], 0
    %13 = vsyncpa [#allocation9], 0
    // Predicated region
    $region2: #{tpu_custom_call.1} parent=1 // pred_check
      _
    $region3: #{tpu_custom_call.1} parent=1 // pred_check_branch
      %15 = sbr.rel (0) target = $region5
    $region4: #{tpu_custom_call.1} parent=1 // pred_region
      %s17 = ssub.s32 512, 512
      %18 = vsyncadd [#allocation3], %s17
      %s19 = sshll.u32 [#allocation2], 4
      %s20 = int_to_ptr.vmem [resolvable:$true] %s19
      %25 = dma.hbm_to_vmem [thread:$0]  %s0, 512, %s20, [#allocation3], 128, 128, 8
    $region5: #{tpu_custom_call.1} parent=1 // pred_fallthru
      _
    // Predicated region
    $region6: #{tpu_custom_call.1} parent=1 // pred_check
      _
    $region7: #{tpu_custom_call.1} parent=1 // pred_check_branch
      %27 = sbr.rel (0) target = $region9
    $region8: #{tpu_custom_call.1} parent=1 // pred_region
      %s29 = ssub.s32 512, 512
      %30 = vsyncadd [#allocation6], %s29
      %s31 = sshll.u32 [#allocation5], 4
      %s32 = int_to_ptr.vmem [resolvable:$true] %s31
      %37 = dma.hbm_to_vmem [thread:$0]  %s1, 512, %s32, [#allocation6], 128, 128, 8
    $region9: #{tpu_custom_call.1} parent=1 // pred_fallthru
      _
    // Predicated region
    $region10: #{tpu_custom_call.1} parent=1 // pred_check
      _
    $region11: #{tpu_custom_call.1} parent=1 // pred_check_branch
      %39 = sbr.rel (0) target = $region13
    $region12: #{tpu_custom_call.1} parent=1 // pred_region
      %40 = dma.done [#allocation3], 512
    $region13: #{tpu_custom_call.1} parent=1 // pred_fallthru
      _
    // Predicated region
    $region14: #{tpu_custom_call.1} parent=1 // pred_check
      _
    $region15: #{tpu_custom_call.1} parent=1 // pred_check_branch
      %42 = sbr.rel (0) target = $region17
    $region16: #{tpu_custom_call.1} parent=1 // pred_region
      %43 = dma.done [#allocation6], 512
    $region17: #{tpu_custom_call.1} parent=1 // pred_fallthru
      _
    %v44 = vld [vmem:[#allocation2] sm:$0xff]
    %v45 = vld [vmem:[#allocation2 + $0x8] sm:$0xff]
    %v46 = vld [vmem:[#allocation2 + $0x10] sm:$0xff]
    %v47 = vld [vmem:[#allocation2 + $0x18] sm:$0xff]
    %v48 = vld [vmem:[#allocation5] sm:$0xff]
    %v49 = vld [vmem:[#allocation5 + $0x8] sm:$0xff]
    %v50 = vld [vmem:[#allocation5 + $0x10] sm:$0xff]
    %v51 = vld [vmem:[#allocation5 + $0x18] sm:$0xff]
    %vm52 = vcmask 261120
    %v54 = vsel %vm52, %v44, 0
    %v57 = vsel %vm52, %v45, 0
    %v60 = vsel %vm52, %v46, 0
    %v63 = vsel %vm52, %v47, 0
    %65 = vmatprep.subr.mxu0 0.0
    %66 = vmatpush1.msra.mxu0 0.0
    %67 = vmatprep.subr.mxu0 0.0
    %68 = vmatpush1.msra.mxu0 0.0
    %69 = vmatprep.subr.mxu0 0.0
    %70 = vmatpush1.msra.mxu0 0.0
    %71 = vmatprep.subr.mxu0 0.0
    %72 = vmatpush1.msra.mxu0 0.0
    %73 = vmatprep.subr.mxu0 0.0
    %74 = vmatpush1.msra.mxu0 0.0
    %75 = vmatprep.subr.mxu0 0.0
    %76 = vmatpush1.msra.mxu0 0.0
    %77 = vmatprep.subr.mxu0 0.0
    %78 = vmatpush1.msra.mxu0 0.0
    %79 = vmatprep.subr.mxu0 0.0
    %80 = vmatpush1.msra.mxu0 0.0
    %81 = vmatprep.subr.mxu0 0.0
    %82 = vmatpush1.msra.mxu0 0.0
    %83 = vmatprep.subr.mxu0 0.0
    %84 = vmatpush1.msra.mxu0 0.0
    %85 = vmatprep.subr.mxu0 0.0
    %86 = vmatpush1.msra.mxu0 0.0
    %87 = vmatprep.subr.mxu0 0.0
    %88 = vmatpush1.msra.mxu0 0.0
    %89 = vmatprep.subr.mxu0 0.0
    %v90 = vand.u32 %v51, 4294901760
    %91 = vmatpush1.msra.mxu0 %v90
    %92 = vmatprep.subr.mxu0 0.0
    %v93 = vand.u32 %v50, 4294901760
    %94 = vmatpush1.msra.mxu0 %v93
    %95 = vmatprep.subr.mxu0 0.0
    %v96 = vand.u32 %v49, 4294901760
    %97 = vmatpush1.msra.mxu0 %v96
    %98 = vmatprep.subr.mxu0 0.0
    %v99 = vand.u32 %v48, 4294901760
    %100 = vmatpush1.msra.mxu0 %v99
    %101 = vmatprep.subr.mxu0 0.0
    %102 = vmatpush2.msra.mxu0 0.0
    %103 = vmatprep.subr.mxu0 0.0
    %104 = vmatpush2.msra.mxu0 0.0
    %105 = vmatprep.subr.mxu0 0.0
    %106 = vmatpush2.msra.mxu0 0.0
    %107 = vmatprep.subr.mxu0 0.0
    %108 = vmatpush2.msra.mxu0 0.0
    %109 = vmatprep.subr.mxu0 0.0
    %110 = vmatpush2.msra.mxu0 0.0
    %111 = vmatprep.subr.mxu0 0.0
    %112 = vmatpush2.msra.mxu0 0.0
    %113 = vmatprep.subr.mxu0 0.0
    %114 = vmatpush2.msra.mxu0 0.0
    %115 = vmatprep.subr.mxu0 0.0
    %116 = vmatpush2.msra.mxu0 0.0
    %117 = vmatprep.subr.mxu0 0.0
    %118 = vmatpush2.msra.mxu0 0.0
    %119 = vmatprep.subr.mxu0 0.0
    %120 = vmatpush2.msra.mxu0 0.0
    %121 = vmatprep.subr.mxu0 0.0
    %122 = vmatpush2.msra.mxu0 0.0
    %123 = vmatprep.subr.mxu0 0.0
    %124 = vmatpush2.msra.mxu0 0.0
    %125 = vmatprep.subr.mxu0 0.0
    %126 = vmatpush2.msra.mxu0 0.0
    %127 = vmatprep.subr.mxu0 0.0
    %128 = vmatpush2.msra.mxu0 0.0
    %129 = vmatprep.subr.mxu0 0.0
    %130 = vmatpush2.msra.mxu0 0.0
    %131 = vmatprep.subr.mxu0 0.0
    %132 = vmatpush2.msra.mxu0 0.0
    %133 = vmatprep.mubr.f32.mxu0 0.0
    %v134 = vand.u32 %v54, 4294901760
    %v135 = vsub.f32 %v54, %v134
    %v136 = vand.u32 %v135, 4294901760
    %v137 = vsub.f32 %v135, %v136
    %v138 = vand.u32 %v137, 4294901760
    %139 = vmatmul.mubr.f32.gmra.mxu0 %v138
    %v140 = vpop.f32.mrf.mxu0
    %v141 = vadd.f32 0.0, %v140
    %v142 = vpop.f32.mrf.mxu0
    %143 = vmatprep.mubr.f32.mxu0 0.0
    %v144 = vand.u32 %v57, 4294901760
    %v145 = vsub.f32 %v57, %v144
    %v146 = vand.u32 %v145, 4294901760
    %v147 = vsub.f32 %v145, %v146
    %v148 = vand.u32 %v147, 4294901760
    %149 = vmatmul.mubr.f32.gmra.mxu0 %v148
    %v150 = vpop.f32.mrf.mxu0
    %v151 = vadd.f32 0.0, %v150
    %v152 = vpop.f32.mrf.mxu0
    %153 = vmatprep.mubr.f32.mxu0 0.0
    %v154 = vand.u32 %v60, 4294901760
    %v155 = vsub.f32 %v60, %v154
    %v156 = vand.u32 %v155, 4294901760
    %v157 = vsub.f32 %v155, %v156
    %v158 = vand.u32 %v157, 4294901760
    %159 = vmatmul.mubr.f32.gmra.mxu0 %v158
    %v160 = vpop.f32.mrf.mxu0
    %v161 = vadd.f32 0.0, %v160
    %v162 = vpop.f32.mrf.mxu0
    %163 = vmatprep.mubr.f32.mxu0 0.0
    %v164 = vand.u32 %v63, 4294901760
    %v165 = vsub.f32 %v63, %v164
    %v166 = vand.u32 %v165, 4294901760
    %v167 = vsub.f32 %v165, %v166
    %v168 = vand.u32 %v167, 4294901760
    %169 = vmatmul.mubr.f32.gmra.mxu0 %v168
    %v170 = vpop.f32.mrf.mxu0
    %v171 = vadd.f32 0.0, %v170
    %v172 = vpop.f32.mrf.mxu0
    %173 = vdwg.mxu0
    %174 = vmatprep.subr.mxu0 0.0
    %175 = vmatpush1.msra.mxu0 0.0
    %176 = vmatprep.subr.mxu0 0.0
    %177 = vmatpush1.msra.mxu0 0.0
    %178 = vmatprep.subr.mxu0 0.0
    %179 = vmatpush1.msra.mxu0 0.0
    %180 = vmatprep.subr.mxu0 0.0
    %181 = vmatpush1.msra.mxu0 0.0
    %182 = vmatprep.subr.mxu0 0.0
    %183 = vmatpush1.msra.mxu0 0.0
    %184 = vmatprep.subr.mxu0 0.0
    %185 = vmatpush1.msra.mxu0 0.0
    %186 = vmatprep.subr.mxu0 0.0
    %187 = vmatpush1.msra.mxu0 0.0
    %188 = vmatprep.subr.mxu0 0.0
    %189 = vmatpush1.msra.mxu0 0.0
    %190 = vmatprep.subr.mxu0 0.0
    %191 = vmatpush1.msra.mxu0 0.0
    %192 = vmatprep.subr.mxu0 0.0
    %193 = vmatpush1.msra.mxu0 0.0
    %194 = vmatprep.subr.mxu0 0.0
    %195 = vmatpush1.msra.mxu0 0.0
    %196 = vmatprep.subr.mxu0 0.0
    %197 = vmatpush1.msra.mxu0 0.0
    %198 = vmatprep.subr.mxu0 0.0
    %v199 = vand.u32 %v51, 4294901760
    %v200 = vsub.f32 %v51, %v199
    %v201 = vand.u32 %v200, 4294901760
    %v202 = vsub.f32 %v200, %v201
    %v203 = vand.u32 %v202, 4294901760
    %204 = vmatpush1.msra.mxu0 %v203
    %205 = vmatprep.subr.mxu0 0.0
    %v206 = vand.u32 %v50, 4294901760
    %v207 = vsub.f32 %v50, %v206
    %v208 = vand.u32 %v207, 4294901760
    %v209 = vsub.f32 %v207, %v208
    %v210 = vand.u32 %v209, 4294901760
    %211 = vmatpush1.msra.mxu0 %v210
    %212 = vmatprep.subr.mxu0 0.0
    %v213 = vand.u32 %v49, 4294901760
    %v214 = vsub.f32 %v49, %v213
    %v215 = vand.u32 %v214, 4294901760
    %v216 = vsub.f32 %v214, %v215
    %v217 = vand.u32 %v216, 4294901760
    %218 = vmatpush1.msra.mxu0 %v217
    %219 = vmatprep.subr.mxu0 0.0
    %v220 = vand.u32 %v48, 4294901760
    %v221 = vsub.f32 %v48, %v220
    %v222 = vand.u32 %v221, 4294901760
    %v223 = vsub.f32 %v221, %v222
    %v224 = vand.u32 %v223, 4294901760
    %225 = vmatpush1.msra.mxu0 %v224
    %226 = vmatprep.subr.mxu0 0.0
    %227 = vmatpush2.msra.mxu0 0.0
    %228 = vmatprep.subr.mxu0 0.0
    %229 = vmatpush2.msra.mxu0 0.0
    %230 = vmatprep.subr.mxu0 0.0
    %231 = vmatpush2.msra.mxu0 0.0
    %232 = vmatprep.subr.mxu0 0.0
    %233 = vmatpush2.msra.mxu0 0.0
    %234 = vmatprep.subr.mxu0 0.0
    %235 = vmatpush2.msra.mxu0 0.0
    %236 = vmatprep.subr.mxu0 0.0
    %237 = vmatpush2.msra.mxu0 0.0
    %238 = vmatprep.subr.mxu0 0.0
    %239 = vmatpush2.msra.mxu0 0.0
    %240 = vmatprep.subr.mxu0 0.0
    %241 = vmatpush2.msra.mxu0 0.0
    %242 = vmatprep.subr.mxu0 0.0
    %243 = vmatpush2.msra.mxu0 0.0
    %244 = vmatprep.subr.mxu0 0.0
    %245 = vmatpush2.msra.mxu0 0.0
    %246 = vmatprep.subr.mxu0 0.0
    %247 = vmatpush2.msra.mxu0 0.0
    %248 = vmatprep.subr.mxu0 0.0
    %249 = vmatpush2.msra.mxu0 0.0
    %250 = vmatprep.subr.mxu0 0.0
    %251 = vmatpush2.msra.mxu0 0.0
    %252 = vmatprep.subr.mxu0 0.0
    %253 = vmatpush2.msra.mxu0 0.0
    %254 = vmatprep.subr.mxu0 0.0
    %255 = vmatpush2.msra.mxu0 0.0
    %256 = vmatprep.subr.mxu0 0.0
    %257 = vmatpush2.msra.mxu0 0.0
    %258 = vmatprep.mubr.f32.mxu0 0.0
    %v259 = vand.u32 %v54, 4294901760
    %260 = vmatmul.mubr.f32.gmra.mxu0 %v259
    %v261 = vpop.f32.mrf.mxu0
    %v262 = vadd.f32 %v141, %v261
    %v263 = vpop.f32.mrf.mxu0
    %264 = vmatprep.mubr.f32.mxu0 0.0
    %v265 = vand.u32 %v57, 4294901760
    %266 = vmatmul.mubr.f32.gmra.mxu0 %v265
    %v267 = vpop.f32.mrf.mxu0
    %v268 = vadd.f32 %v151, %v267
    %v269 = vpop.f32.mrf.mxu0
    %270 = vmatprep.mubr.f32.mxu0 0.0
    %v271 = vand.u32 %v60, 4294901760
    %272 = vmatmul.mubr.f32.gmra.mxu0 %v271
    %v273 = vpop.f32.mrf.mxu0
    %v274 = vadd.f32 %v161, %v273
    %v275 = vpop.f32.mrf.mxu0
    %276 = vmatprep.mubr.f32.mxu0 0.0
    %v277 = vand.u32 %v63, 4294901760
    %278 = vmatmul.mubr.f32.gmra.mxu0 %v277
    %v279 = vpop.f32.mrf.mxu0
    %v280 = vadd.f32 %v171, %v279
    %v281 = vpop.f32.mrf.mxu0
    %282 = vdwg.mxu0
    %283 = vmatprep.subr.mxu0 0.0
    %284 = vmatpush1.msra.mxu0 0.0
    %285 = vmatprep.subr.mxu0 0.0
    %286 = vmatpush1.msra.mxu0 0.0
    %287 = vmatprep.subr.mxu0 0.0
    %288 = vmatpush1.msra.mxu0 0.0
    %289 = vmatprep.subr.mxu0 0.0
    %290 = vmatpush1.msra.mxu0 0.0
    %291 = vmatprep.subr.mxu0 0.0
    %292 = vmatpush1.msra.mxu0 0.0
    %293 = vmatprep.subr.mxu0 0.0
    %294 = vmatpush1.msra.mxu0 0.0
    %295 = vmatprep.subr.mxu0 0.0
    %296 = vmatpush1.msra.mxu0 0.0
    %297 = vmatprep.subr.mxu0 0.0
    %298 = vmatpush1.msra.mxu0 0.0
    %299 = vmatprep.subr.mxu0 0.0
    %300 = vmatpush1.msra.mxu0 0.0
    %301 = vmatprep.subr.mxu0 0.0
    %302 = vmatpush1.msra.mxu0 0.0
    %303 = vmatprep.subr.mxu0 0.0
    %304 = vmatpush1.msra.mxu0 0.0
    %305 = vmatprep.subr.mxu0 0.0
    %306 = vmatpush1.msra.mxu0 0.0
    %307 = vmatprep.subr.mxu0 0.0
    %v308 = vand.u32 %v51, 4294901760
    %v309 = vsub.f32 %v51, %v308
    %310 = vmatpush1.msra.mxu0 %v309
    %311 = vmatprep.subr.mxu0 0.0
    %v312 = vand.u32 %v50, 4294901760
    %v313 = vsub.f32 %v50, %v312
    %314 = vmatpush1.msra.mxu0 %v313
    %315 = vmatprep.subr.mxu0 0.0
    %v316 = vand.u32 %v49, 4294901760
    %v317 = vsub.f32 %v49, %v316
    %318 = vmatpush1.msra.mxu0 %v317
    %319 = vmatprep.subr.mxu0 0.0
    %v320 = vand.u32 %v48, 4294901760
    %v321 = vsub.f32 %v48, %v320
    %322 = vmatpush1.msra.mxu0 %v321
    %323 = vmatprep.subr.mxu0 0.0
    %324 = vmatpush2.msra.mxu0 0.0
    %325 = vmatprep.subr.mxu0 0.0
    %326 = vmatpush2.msra.mxu0 0.0
    %327 = vmatprep.subr.mxu0 0.0
    %328 = vmatpush2.msra.mxu0 0.0
    %329 = vmatprep.subr.mxu0 0.0
    %330 = vmatpush2.msra.mxu0 0.0
    %331 = vmatprep.subr.mxu0 0.0
    %332 = vmatpush2.msra.mxu0 0.0
    %333 = vmatprep.subr.mxu0 0.0
    %334 = vmatpush2.msra.mxu0 0.0
    %335 = vmatprep.subr.mxu0 0.0
    %336 = vmatpush2.msra.mxu0 0.0
    %337 = vmatprep.subr.mxu0 0.0
    %338 = vmatpush2.msra.mxu0 0.0
    %339 = vmatprep.subr.mxu0 0.0
    %340 = vmatpush2.msra.mxu0 0.0
    %341 = vmatprep.subr.mxu0 0.0
    %342 = vmatpush2.msra.mxu0 0.0
    %343 = vmatprep.subr.mxu0 0.0
    %344 = vmatpush2.msra.mxu0 0.0
    %345 = vmatprep.subr.mxu0 0.0
    %346 = vmatpush2.msra.mxu0 0.0
    %347 = vmatprep.subr.mxu0 0.0
    %348 = vmatpush2.msra.mxu0 0.0
    %349 = vmatprep.subr.mxu0 0.0
    %350 = vmatpush2.msra.mxu0 0.0
    %351 = vmatprep.subr.mxu0 0.0
    %352 = vmatpush2.msra.mxu0 0.0
    %353 = vmatprep.subr.mxu0 0.0
    %354 = vmatpush2.msra.mxu0 0.0
    %355 = vmatprep.mubr.f32.mxu0 0.0
    %v356 = vand.u32 %v54, 4294901760
    %v357 = vsub.f32 %v54, %v356
    %358 = vmatmul.mubr.f32.gmra.mxu0 %v357
    %v359 = vpop.f32.mrf.mxu0
    %v360 = vadd.f32 %v262, %v359
    %v361 = vpop.f32.mrf.mxu0
    %362 = vmatprep.mubr.f32.mxu0 0.0
    %v363 = vand.u32 %v57, 4294901760
    %v364 = vsub.f32 %v57, %v363
    %365 = vmatmul.mubr.f32.gmra.mxu0 %v364
    %v366 = vpop.f32.mrf.mxu0
    %v367 = vadd.f32 %v268, %v366
    %v368 = vpop.f32.mrf.mxu0
    %369 = vmatprep.mubr.f32.mxu0 0.0
    %v370 = vand.u32 %v60, 4294901760
    %v371 = vsub.f32 %v60, %v370
    %372 = vmatmul.mubr.f32.gmra.mxu0 %v371
    %v373 = vpop.f32.mrf.mxu0
    %v374 = vadd.f32 %v274, %v373
    %v375 = vpop.f32.mrf.mxu0
    %376 = vmatprep.mubr.f32.mxu0 0.0
    %v377 = vand.u32 %v63, 4294901760
    %v378 = vsub.f32 %v63, %v377
    %379 = vmatmul.mubr.f32.gmra.mxu0 %v378
    %v380 = vpop.f32.mrf.mxu0
    %v381 = vadd.f32 %v280, %v380
    %v382 = vpop.f32.mrf.mxu0
    %383 = vdwg.mxu0
    %384 = vmatprep.subr.mxu0 0.0
    %385 = vmatpush1.msra.mxu0 0.0
    %386 = vmatprep.subr.mxu0 0.0
    %387 = vmatpush1.msra.mxu0 0.0
    %388 = vmatprep.subr.mxu0 0.0
    %389 = vmatpush1.msra.mxu0 0.0
    %390 = vmatprep.subr.mxu0 0.0
    %391 = vmatpush1.msra.mxu0 0.0
    %392 = vmatprep.subr.mxu0 0.0
    %393 = vmatpush1.msra.mxu0 0.0
    %394 = vmatprep.subr.mxu0 0.0
    %395 = vmatpush1.msra.mxu0 0.0
    %396 = vmatprep.subr.mxu0 0.0
    %397 = vmatpush1.msra.mxu0 0.0
    %398 = vmatprep.subr.mxu0 0.0
    %399 = vmatpush1.msra.mxu0 0.0
    %400 = vmatprep.subr.mxu0 0.0
    %401 = vmatpush1.msra.mxu0 0.0
    %402 = vmatprep.subr.mxu0 0.0
    %403 = vmatpush1.msra.mxu0 0.0
    %404 = vmatprep.subr.mxu0 0.0
    %405 = vmatpush1.msra.mxu0 0.0
    %406 = vmatprep.subr.mxu0 0.0
    %407 = vmatpush1.msra.mxu0 0.0
    %408 = vmatprep.subr.mxu0 0.0
    %v409 = vand.u32 %v51, 4294901760
    %410 = vmatpush1.msra.mxu0 %v409
    %411 = vmatprep.subr.mxu0 0.0
    %v412 = vand.u32 %v50, 4294901760
    %413 = vmatpush1.msra.mxu0 %v412
    %414 = vmatprep.subr.mxu0 0.0
    %v415 = vand.u32 %v49, 4294901760
    %416 = vmatpush1.msra.mxu0 %v415
    %417 = vmatprep.subr.mxu0 0.0
    %v418 = vand.u32 %v48, 4294901760
    %419 = vmatpush1.msra.mxu0 %v418
    %420 = vmatprep.subr.mxu0 0.0
    %421 = vmatpush2.msra.mxu0 0.0
    %422 = vmatprep.subr.mxu0 0.0
    %423 = vmatpush2.msra.mxu0 0.0
    %424 = vmatprep.subr.mxu0 0.0
    %425 = vmatpush2.msra.mxu0 0.0
    %426 = vmatprep.subr.mxu0 0.0
    %427 = vmatpush2.msra.mxu0 0.0
    %428 = vmatprep.subr.mxu0 0.0
    %429 = vmatpush2.msra.mxu0 0.0
    %430 = vmatprep.subr.mxu0 0.0
    %431 = vmatpush2.msra.mxu0 0.0
    %432 = vmatprep.subr.mxu0 0.0
    %433 = vmatpush2.msra.mxu0 0.0
    %434 = vmatprep.subr.mxu0 0.0
    %435 = vmatpush2.msra.mxu0 0.0
    %436 = vmatprep.subr.mxu0 0.0
    %437 = vmatpush2.msra.mxu0 0.0
    %438 = vmatprep.subr.mxu0 0.0
    %439 = vmatpush2.msra.mxu0 0.0
    %440 = vmatprep.subr.mxu0 0.0
    %441 = vmatpush2.msra.mxu0 0.0
    %442 = vmatprep.subr.mxu0 0.0
    %443 = vmatpush2.msra.mxu0 0.0
    %444 = vmatprep.subr.mxu0 0.0
    %445 = vmatpush2.msra.mxu0 0.0
    %446 = vmatprep.subr.mxu0 0.0
    %447 = vmatpush2.msra.mxu0 0.0
    %448 = vmatprep.subr.mxu0 0.0
    %449 = vmatpush2.msra.mxu0 0.0
    %450 = vmatprep.subr.mxu0 0.0
    %451 = vmatpush2.msra.mxu0 0.0
    %452 = vmatprep.mubr.f32.mxu0 0.0
    %v453 = vand.u32 %v54, 4294901760
    %v454 = vsub.f32 %v54, %v453
    %v455 = vand.u32 %v454, 4294901760
    %456 = vmatmul.mubr.f32.gmra.mxu0 %v455
    %v457 = vpop.f32.mrf.mxu0
    %v458 = vadd.f32 %v360, %v457
    %v459 = vpop.f32.mrf.mxu0
    %460 = vmatprep.mubr.f32.mxu0 0.0
    %v461 = vand.u32 %v57, 4294901760
    %v462 = vsub.f32 %v57, %v461
    %v463 = vand.u32 %v462, 4294901760
    %464 = vmatmul.mubr.f32.gmra.mxu0 %v463
    %v465 = vpop.f32.mrf.mxu0
    %v466 = vadd.f32 %v367, %v465
    %v467 = vpop.f32.mrf.mxu0
    %468 = vmatprep.mubr.f32.mxu0 0.0
    %v469 = vand.u32 %v60, 4294901760
    %v470 = vsub.f32 %v60, %v469
    %v471 = vand.u32 %v470, 4294901760
    %472 = vmatmul.mubr.f32.gmra.mxu0 %v471
    %v473 = vpop.f32.mrf.mxu0
    %v474 = vadd.f32 %v374, %v473
    %v475 = vpop.f32.mrf.mxu0
    %476 = vmatprep.mubr.f32.mxu0 0.0
    %v477 = vand.u32 %v63, 4294901760
    %v478 = vsub.f32 %v63, %v477
    %v479 = vand.u32 %v478, 4294901760
    %480 = vmatmul.mubr.f32.gmra.mxu0 %v479
    %v481 = vpop.f32.mrf.mxu0
    %v482 = vadd.f32 %v381, %v481
    %v483 = vpop.f32.mrf.mxu0
    %484 = vdwg.mxu0
    %485 = vmatprep.subr.mxu0 0.0
    %486 = vmatpush1.msra.mxu0 0.0
    %487 = vmatprep.subr.mxu0 0.0
    %488 = vmatpush1.msra.mxu0 0.0
    %489 = vmatprep.subr.mxu0 0.0
    %490 = vmatpush1.msra.mxu0 0.0
    %491 = vmatprep.subr.mxu0 0.0
    %492 = vmatpush1.msra.mxu0 0.0
    %493 = vmatprep.subr.mxu0 0.0
    %494 = vmatpush1.msra.mxu0 0.0
    %495 = vmatprep.subr.mxu0 0.0
    %496 = vmatpush1.msra.mxu0 0.0
    %497 = vmatprep.subr.mxu0 0.0
    %498 = vmatpush1.msra.mxu0 0.0
    %499 = vmatprep.subr.mxu0 0.0
    %500 = vmatpush1.msra.mxu0 0.0
    %501 = vmatprep.subr.mxu0 0.0
    %502 = vmatpush1.msra.mxu0 0.0
    %503 = vmatprep.subr.mxu0 0.0
    %504 = vmatpush1.msra.mxu0 0.0
    %505 = vmatprep.subr.mxu0 0.0
    %506 = vmatpush1.msra.mxu0 0.0
    %507 = vmatprep.subr.mxu0 0.0
    %508 = vmatpush1.msra.mxu0 0.0
    %509 = vmatprep.subr.mxu0 0.0
    %v510 = vand.u32 %v51, 4294901760
    %v511 = vsub.f32 %v51, %v510
    %v512 = vand.u32 %v511, 4294901760
    %513 = vmatpush1.msra.mxu0 %v512
    %514 = vmatprep.subr.mxu0 0.0
    %v515 = vand.u32 %v50, 4294901760
    %v516 = vsub.f32 %v50, %v515
    %v517 = vand.u32 %v516, 4294901760
    %518 = vmatpush1.msra.mxu0 %v517
    %519 = vmatprep.subr.mxu0 0.0
    %v520 = vand.u32 %v49, 4294901760
    %v521 = vsub.f32 %v49, %v520
    %v522 = vand.u32 %v521, 4294901760
    %523 = vmatpush1.msra.mxu0 %v522
    %524 = vmatprep.subr.mxu0 0.0
    %v525 = vand.u32 %v48, 4294901760
    %v526 = vsub.f32 %v48, %v525
    %v527 = vand.u32 %v526, 4294901760
    %528 = vmatpush1.msra.mxu0 %v527
    %529 = vmatprep.subr.mxu0 0.0
    %530 = vmatpush2.msra.mxu0 0.0
    %531 = vmatprep.subr.mxu0 0.0
    %532 = vmatpush2.msra.mxu0 0.0
    %533 = vmatprep.subr.mxu0 0.0
    %534 = vmatpush2.msra.mxu0 0.0
    %535 = vmatprep.subr.mxu0 0.0
    %536 = vmatpush2.msra.mxu0 0.0
    %537 = vmatprep.subr.mxu0 0.0
    %538 = vmatpush2.msra.mxu0 0.0
    %539 = vmatprep.subr.mxu0 0.0
    %540 = vmatpush2.msra.mxu0 0.0
    %541 = vmatprep.subr.mxu0 0.0
    %542 = vmatpush2.msra.mxu0 0.0
    %543 = vmatprep.subr.mxu0 0.0
    %544 = vmatpush2.msra.mxu0 0.0
    %545 = vmatprep.subr.mxu0 0.0
    %546 = vmatpush2.msra.mxu0 0.0
    %547 = vmatprep.subr.mxu0 0.0
    %548 = vmatpush2.msra.mxu0 0.0
    %549 = vmatprep.subr.mxu0 0.0
    %550 = vmatpush2.msra.mxu0 0.0
    %551 = vmatprep.subr.mxu0 0.0
    %552 = vmatpush2.msra.mxu0 0.0
    %553 = vmatprep.subr.mxu0 0.0
    %554 = vmatpush2.msra.mxu0 0.0
    %555 = vmatprep.subr.mxu0 0.0
    %556 = vmatpush2.msra.mxu0 0.0
    %557 = vmatprep.subr.mxu0 0.0
    %558 = vmatpush2.msra.mxu0 0.0
    %559 = vmatprep.subr.mxu0 0.0
    %560 = vmatpush2.msra.mxu0 0.0
    %561 = vmatprep.mubr.f32.mxu0 0.0
    %v562 = vand.u32 %v54, 4294901760
    %563 = vmatmul.mubr.f32.gmra.mxu0 %v562
    %v564 = vpop.f32.mrf.mxu0
    %v565 = vadd.f32 %v458, %v564
    %v566 = vpop.f32.mrf.mxu0
    %567 = vmatprep.mubr.f32.mxu0 0.0
    %v568 = vand.u32 %v57, 4294901760
    %569 = vmatmul.mubr.f32.gmra.mxu0 %v568
    %v570 = vpop.f32.mrf.mxu0
    %v571 = vadd.f32 %v466, %v570
    %v572 = vpop.f32.mrf.mxu0
    %573 = vmatprep.mubr.f32.mxu0 0.0
    %v574 = vand.u32 %v60, 4294901760
    %575 = vmatmul.mubr.f32.gmra.mxu0 %v574
    %v576 = vpop.f32.mrf.mxu0
    %v577 = vadd.f32 %v474, %v576
    %v578 = vpop.f32.mrf.mxu0
    %579 = vmatprep.mubr.f32.mxu0 0.0
    %v580 = vand.u32 %v63, 4294901760
    %581 = vmatmul.mubr.f32.gmra.mxu0 %v580
    %v582 = vpop.f32.mrf.mxu0
    %v583 = vadd.f32 %v482, %v582
    %v584 = vpop.f32.mrf.mxu0
    %585 = vdwg.mxu0
    %586 = vmatprep.subr.mxu0 0.0
    %587 = vmatpush1.msra.mxu0 0.0
    %588 = vmatprep.subr.mxu0 0.0
    %589 = vmatpush1.msra.mxu0 0.0
    %590 = vmatprep.subr.mxu0 0.0
    %591 = vmatpush1.msra.mxu0 0.0
    %592 = vmatprep.subr.mxu0 0.0
    %593 = vmatpush1.msra.mxu0 0.0
    %594 = vmatprep.subr.mxu0 0.0
    %595 = vmatpush1.msra.mxu0 0.0
    %596 = vmatprep.subr.mxu0 0.0
    %597 = vmatpush1.msra.mxu0 0.0
    %598 = vmatprep.subr.mxu0 0.0
    %599 = vmatpush1.msra.mxu0 0.0
    %600 = vmatprep.subr.mxu0 0.0
    %601 = vmatpush1.msra.mxu0 0.0
    %602 = vmatprep.subr.mxu0 0.0
    %603 = vmatpush1.msra.mxu0 0.0
    %604 = vmatprep.subr.mxu0 0.0
    %605 = vmatpush1.msra.mxu0 0.0
    %606 = vmatprep.subr.mxu0 0.0
    %607 = vmatpush1.msra.mxu0 0.0
    %608 = vmatprep.subr.mxu0 0.0
    %609 = vmatpush1.msra.mxu0 0.0
    %610 = vmatprep.subr.mxu0 0.0
    %v611 = vand.u32 %v51, 4294901760
    %612 = vmatpush1.msra.mxu0 %v611
    %613 = vmatprep.subr.mxu0 0.0
    %v614 = vand.u32 %v50, 4294901760
    %615 = vmatpush1.msra.mxu0 %v614
    %616 = vmatprep.subr.mxu0 0.0
    %v617 = vand.u32 %v49, 4294901760
    %618 = vmatpush1.msra.mxu0 %v617
    %619 = vmatprep.subr.mxu0 0.0
    %v620 = vand.u32 %v48, 4294901760
    %621 = vmatpush1.msra.mxu0 %v620
    %622 = vmatprep.subr.mxu0 0.0
    %623 = vmatpush2.msra.mxu0 0.0
    %624 = vmatprep.subr.mxu0 0.0
    %625 = vmatpush2.msra.mxu0 0.0
    %626 = vmatprep.subr.mxu0 0.0
    %627 = vmatpush2.msra.mxu0 0.0
    %628 = vmatprep.subr.mxu0 0.0
    %629 = vmatpush2.msra.mxu0 0.0
    %630 = vmatprep.subr.mxu0 0.0
    %631 = vmatpush2.msra.mxu0 0.0
    %632 = vmatprep.subr.mxu0 0.0
    %633 = vmatpush2.msra.mxu0 0.0
    %634 = vmatprep.subr.mxu0 0.0
    %635 = vmatpush2.msra.mxu0 0.0
    %636 = vmatprep.subr.mxu0 0.0
    %637 = vmatpush2.msra.mxu0 0.0
    %638 = vmatprep.subr.mxu0 0.0
    %639 = vmatpush2.msra.mxu0 0.0
    %640 = vmatprep.subr.mxu0 0.0
    %641 = vmatpush2.msra.mxu0 0.0
    %642 = vmatprep.subr.mxu0 0.0
    %643 = vmatpush2.msra.mxu0 0.0
    %644 = vmatprep.subr.mxu0 0.0
    %645 = vmatpush2.msra.mxu0 0.0
    %646 = vmatprep.subr.mxu0 0.0
    %647 = vmatpush2.msra.mxu0 0.0
    %648 = vmatprep.subr.mxu0 0.0
    %649 = vmatpush2.msra.mxu0 0.0
    %650 = vmatprep.subr.mxu0 0.0
    %651 = vmatpush2.msra.mxu0 0.0
    %652 = vmatprep.subr.mxu0 0.0
    %653 = vmatpush2.msra.mxu0 0.0
    %654 = vmatprep.mubr.f32.mxu0 0.0
    %v655 = vand.u32 %v54, 4294901760
    %656 = vmatmul.mubr.f32.gmra.mxu0 %v655
    %v657 = vpop.f32.mrf.mxu0
    %v658 = vadd.f32 %v565, %v657
    %v659 = vpop.f32.mrf.mxu0
    %660 = vmatprep.mubr.f32.mxu0 0.0
    %v661 = vand.u32 %v57, 4294901760
    %662 = vmatmul.mubr.f32.gmra.mxu0 %v661
    %v663 = vpop.f32.mrf.mxu0
    %v664 = vadd.f32 %v571, %v663
    %v665 = vpop.f32.mrf.mxu0
    %666 = vmatprep.mubr.f32.mxu0 0.0
    %v667 = vand.u32 %v60, 4294901760
    %668 = vmatmul.mubr.f32.gmra.mxu0 %v667
    %v669 = vpop.f32.mrf.mxu0
    %v670 = vadd.f32 %v577, %v669
    %v671 = vpop.f32.mrf.mxu0
    %672 = vmatprep.mubr.f32.mxu0 0.0
    %v673 = vand.u32 %v63, 4294901760
    %674 = vmatmul.mubr.f32.gmra.mxu0 %v673
    %v675 = vpop.f32.mrf.mxu0
    %v676 = vadd.f32 %v583, %v675
    %v677 = vpop.f32.mrf.mxu0
    %678 = vdwg.mxu0
    %679 = vst.msk [vmem:[#allocation7] sm:$0xff] %vm52, %v658
    %680 = vst.msk [vmem:[#allocation7 + $0x8] sm:$0xff] %vm52, %v664
    %681 = vst.msk [vmem:[#allocation7 + $0x10] sm:$0xff] %vm52, %v670
    %682 = vst.msk [vmem:[#allocation7 + $0x18] sm:$0xff] %vm52, %v676
    %687 = vrot.lane.b32.xlu0 %v658, 96
    %v688 = vpop.permute.xlu0 %687
    %689 = vrot.lane.b32.xlu0 %v664, 96
    %v690 = vpop.permute.xlu0 %689
    %691 = vrot.lane.b32.xlu0 %v670, 96
    %v692 = vpop.permute.xlu0 %691
    %693 = vrot.lane.b32.xlu0 %v676, 96
    %v694 = vpop.permute.xlu0 %693
    %699 = vst.msk [vmem:[#allocation8] sm:$0xff] %vm52, %v688
    %700 = vst.msk [vmem:[#allocation8 + $0x8] sm:$0xff] %vm52, %v690
    %701 = vst.msk [vmem:[#allocation8 + $0x10] sm:$0xff] %vm52, %v692
    %702 = vst.msk [vmem:[#allocation8 + $0x18] sm:$0xff] %vm52, %v694
    %703 = vrot.lane.b32.xlu0 %v658, 64
    %v704 = vpop.permute.xlu0 %703
    %705 = vrot.lane.b32.xlu0 %v664, 64
    %v706 = vpop.permute.xlu0 %705
    %707 = vrot.lane.b32.xlu0 %v670, 64
    %v708 = vpop.permute.xlu0 %707
    %709 = vrot.lane.b32.xlu0 %v676, 64
    %v710 = vpop.permute.xlu0 %709
    %715 = vst.msk [vmem:[#allocation10] sm:$0xff] %vm52, %v704
    %716 = vst.msk [vmem:[#allocation10 + $0x8] sm:$0xff] %vm52, %v706
    %717 = vst.msk [vmem:[#allocation10 + $0x10] sm:$0xff] %vm52, %v708
    %718 = vst.msk [vmem:[#allocation10 + $0x18] sm:$0xff] %vm52, %v710
    // Predicated region
    $region18: #{tpu_custom_call.1} parent=1 // pred_check
      _
    $region19: #{tpu_custom_call.1} parent=1 // pred_check_branch
      %720 = sbr.rel (0) target = $region21
    $region20: #{tpu_custom_call.1} parent=1 // pred_region
      %s722 = ssub.s32 512, 512
      %723 = vsyncadd [#allocation4], %s722
      %s724 = sshll.u32 [#allocation7], 4
      %s725 = int_to_ptr.vmem [resolvable:$true] %s724
      %730 = dma.vmem_to_hbm [thread:$0]  %s725, 512, %s2, [#allocation4], 128, 128, 8
    $region21: #{tpu_custom_call.1} parent=1 // pred_fallthru
      _
    // Predicated region
    $region22: #{tpu_custom_call.1} parent=1 // pred_check
      _
    $region23: #{tpu_custom_call.1} parent=1 // pred_check_branch
      %732 = sbr.rel (0) target = $region25
    $region24: #{tpu_custom_call.1} parent=1 // pred_region
      %s734 = ssub.s32 512, 512
      %735 = vsyncadd [#allocation9], %s734
      %s736 = sshll.u32 [#allocation8], 4
      %s737 = int_to_ptr.vmem [resolvable:$true] %s736
      %742 = dma.vmem_to_hbm [thread:$0]  %s737, 512, %s3, [#allocation9], 128, 128, 8
    $region25: #{tpu_custom_call.1} parent=1 // pred_fallthru
      _
    // Predicated region
    $region26: #{tpu_custom_call.1} parent=1 // pred_check
      _
    $region27: #{tpu_custom_call.1} parent=1 // pred_check_branch
      %744 = sbr.rel (0) target = $region29
    $region28: #{tpu_custom_call.1} parent=1 // pred_region
      %s746 = ssub.s32 512, 512
      %747 = vsyncadd [#allocation9], %s746
      %s748 = sshll.u32 [#allocation10], 4
      %s749 = int_to_ptr.vmem [resolvable:$true] %s748
      %754 = dma.vmem_to_hbm [thread:$0]  %s749, 512, %s4, [#allocation9], 128, 128, 8
    $region29: #{tpu_custom_call.1} parent=1 // pred_fallthru
      _
    // Predicated region
    $region30: #{tpu_custom_call.1} parent=1 // pred_check
      _
    $region31: #{tpu_custom_call.1} parent=1 // pred_check_branch
      %756 = sbr.rel (0) target = $region33
    $region32: #{tpu_custom_call.1} parent=1 // pred_region
      %757 = dma.done [#allocation4], 512
    $region33: #{tpu_custom_call.1} parent=1 // pred_fallthru
      _
    // Predicated region
    $region34: #{tpu_custom_call.1} parent=1 // pred_check
      _
    $region35: #{tpu_custom_call.1} parent=1 // pred_check_branch
      %759 = sbr.rel (0) target = $region37
    $region36: #{tpu_custom_call.1} parent=1 // pred_region
      %760 = dma.done [#allocation9], 512
    $region37: #{tpu_custom_call.1} parent=1 // pred_fallthru
      _
    // Predicated region
    $region38: #{tpu_custom_call.1} parent=1 // pred_check
      _
    $region39: #{tpu_custom_call.1} parent=1 // pred_check_branch
      %762 = sbr.rel (0) target = $region41
    $region40: #{tpu_custom_call.1} parent=1 // pred_region
      %763 = dma.done [#allocation9], 512
    $region41: #{tpu_custom_call.1} parent=1 // pred_fallthru
      _
    %764 = vsyncpa [#allocation3], 1
    %765 = vsyncpa [#allocation6], 1
    %766 = vsyncpa [#allocation4], 1
    %767 = vsyncpa [#allocation9], 1

</llo_original>
